<compile_context>
chip_gen: v7x
topology: tpu7x:2x2x1
jax: 0.10.0
libtpu: 0.0.40
codegen_flags: <defaults>
</compile_context>

<pallas_src>
import functools

import jax
import jax.numpy as jnp
from jax.experimental import pallas as pl
from jax.experimental.pallas import tpu as pltpu


def _linear_sigmoid_kernel(x_ref, w_ref, b_ref, o_ref):
    """x_ref: (TILE_B, D) VMEM; w_ref: (D, 1) VMEM; b_ref: (1,) SMEM; o_ref: (TILE_B, 1) VMEM."""
    # Single MXU matvec (K=D, N=1); f32 accumulation at full precision.
    z = jnp.dot(
        x_ref[...],
        w_ref[...],
        preferred_element_type=jnp.float32,
        precision=jax.lax.Precision.HIGHEST,
    )  # (TILE_B, 1)
    # Bias is a scalar read from SMEM (sreg broadcast); sigmoid runs on the EUP.
    o_ref[...] = jax.nn.sigmoid(z + b_ref[0])


def _round_up(n: int, m: int) -> int:
    return ((n + m - 1) // m) * m


@functools.partial(jax.jit, static_argnames=("tile_b",))
def binary_classification_forward(x, weight, bias, *, tile_b=8192):
    """sigmoid(x @ weight.T + bias).

    x: (B, D) f32; weight: (1, D) f32 (nn.Linear layout); bias: (1,) f32.
    Returns (B, 1) f32.
    """
    B, D = x.shape
    assert weight.shape == (1, D) and bias.shape == (1,)

    # Batch tile: sublane-aligned (multiple of 8).  Default 8192 rows lane-pad to
    # 4 MiB / tile (double-buffered 8 MiB) -> within every generation's scoped
    # VMEM default.  Cap at ~half the batch so there are >= 2 grid steps and the
    # "parallel" batch axis can use both v7x TensorCores.
    tile_b = max(8, min(tile_b, _round_up(pl.cdiv(B, 2), 8)))
    grid = pl.cdiv(B, tile_b)  # no jnp.pad: boundary block is padded-read / masked-write

    w_col = weight.T  # (D, 1) so the kernel does x @ w on the MXU

    out = pl.pallas_call(
        _linear_sigmoid_kernel,
        out_shape=jax.ShapeDtypeStruct((B, 1), jnp.float32),
        grid=(grid,),
        in_specs=[
            pl.BlockSpec((tile_b, D), lambda i: (i, 0)),            # x batch tile
            pl.BlockSpec((D, 1), lambda i: (0, 0)),                 # weight column (VMEM-resident)
            pl.BlockSpec(memory_space=pltpu.MemorySpace.SMEM),      # bias scalar in SMEM
        ],
        out_specs=pl.BlockSpec((tile_b, 1), lambda i: (i, 0)),
        compiler_params=pltpu.CompilerParams(
            # Batch tiles are independent -> shard across TensorCores (2 TCs on v7x).
            dimension_semantics=("parallel",),
        ),
        cost_estimate=pl.CostEstimate(
            flops=2 * B * D,
            transcendentals=B,
            bytes_accessed=4 * B * (D + 1) + 4 * (D + 1),
        ),
    )(x, w_col, bias)

    return out


if __name__ == "__main__":
    batch = 8
    input_size = 32

    key = jax.random.PRNGKey(0)
    kx, kw, kb = jax.random.split(key, 3)

    # nn.Linear(input_size, 1) init: U(-1/sqrt(D), 1/sqrt(D)) for weight and bias.
    bound = 1.0 / (input_size ** 0.5)
    weight = jax.random.uniform(kw, (1, input_size), jnp.float32, -bound, bound)
    bias = jax.random.uniform(kb, (1,), jnp.float32, -bound, bound)
    x = jax.random.normal(kx, (batch, input_size), jnp.float32)

    out = binary_classification_forward(x, weight, bias)
    out = jax.block_until_ready(out)

    # Reference: same semantics as torch -> sigmoid(x @ W.T + b), computed as an
    # exact f32 VPU reduce (MXU-vs-VPU summation order differs by a few ULPs).
    ref = jax.nn.sigmoid(jnp.sum(x * weight, axis=1, keepdims=True) + bias)
    assert out.shape == (batch, 1)
    assert jnp.allclose(out, ref, atol=1e-5, rtol=1e-5)

    print("KERNEL_OK")
</pallas_src>

<mosaic_0001>
module attributes {stable_mosaic.version = 11 : i64} {
  func.func @_linear_sigmoid_kernel(%arg0: i32, %arg1: memref<8x32xf32, #tpu.memory_space<vmem>>, %arg2: memref<32x1xf32, #tpu.memory_space<vmem>>, %arg3: memref<1xf32, #tpu.memory_space<smem>>, %arg4: memref<8x1xf32, #tpu.memory_space<vmem>>) attributes {dimension_semantics = [#tpu.dimension_semantics<parallel>], iteration_bounds = array<i64: 1>, scalar_prefetch = 0 : i64, scratch_operands = 0 : i64, tpu.core_type = #tpu.core_type<tc>, window_params = [{transform_indices = @transform_0, window_bounds = array<i64: 8, 32>}, {pipeline_mode = #tpu.pipeline_mode<synchronous>, transform_indices = @transform_1, window_bounds = array<i64: 32, 1>}, {transform_indices = @transform_2, window_bounds = array<i64: 1>}, {transform_indices = @transform_3, window_bounds = array<i64: 8, 1>}]} {
    %c0 = arith.constant 0 : index
    %c0_0 = arith.constant 0 : index
    %0 = vector.load %arg1[%c0, %c0_0] : memref<8x32xf32, #tpu.memory_space<vmem>>, vector<8x32xf32>
    %c0_1 = arith.constant 0 : index
    %c0_2 = arith.constant 0 : index
    %1 = vector.load %arg2[%c0_1, %c0_2] : memref<32x1xf32, #tpu.memory_space<vmem>>, vector<32x1xf32>
    %cst = arith.constant dense<0.000000e+00> : vector<8x1xf32>
    %2 = tpu.matmul %0, %1, %cst {dimension_numbers = #tpu.dot_dimension_numbers<[1], [0], [0], [1], [0, 0, 1, 1], [], []>, precision = #tpu.contract_precision<fp32>} : vector<8x32xf32>, vector<32x1xf32>, vector<8x1xf32> -> vector<8x1xf32>
    %c0_3 = arith.constant 0 : index
    %3 = memref.load %arg3[%c0_3] : memref<1xf32, #tpu.memory_space<smem>>
    %4 = vector.broadcast %3 : f32 to vector<8x1xf32>
    %5 = arith.addf %2, %4 : vector<8x1xf32>
    %6 = arith.negf %5 : vector<8x1xf32>
    %7 = math.exp %6 : vector<8x1xf32>
    %cst_4 = arith.constant 1.000000e+00 : f32
    %8 = vector.broadcast %cst_4 : f32 to vector<8x1xf32>
    %9 = arith.addf %8, %7 : vector<8x1xf32>
    %10 = arith.divf %8, %9 : vector<8x1xf32>
    %c0_5 = arith.constant 0 : index
    %c0_6 = arith.constant 0 : index
    %11 = vector.load %arg4[%c0_5, %c0_6] : memref<8x1xf32, #tpu.memory_space<vmem>>, vector<8x1xf32>
    tpu.vector_store %arg4[%c0_5, %c0_6], %10 {strides = array<i32>} : memref<8x1xf32, #tpu.memory_space<vmem>>, vector<8x1xf32>,
    return
  }
  func.func @transform_0(%arg0: i32) -> (i32, i32) {
    %c0_i32 = arith.constant 0 : i32
    %c0_i32_0 = arith.constant 0 : i32
    return %arg0, %c0_i32 : i32, i32
  }
  func.func @transform_1(%arg0: i32) -> (i32, i32) {
    %c0_i32 = arith.constant 0 : i32
    %c0_i32_0 = arith.constant 0 : i32
    %c0_i32_1 = arith.constant 0 : i32
    return %c0_i32, %c0_i32_0 : i32, i32
  }
  func.func @transform_2(%arg0: i32) -> i32 {
    %c0_i32 = arith.constant 0 : i32
    %c0_i32_0 = arith.constant 0 : i32
    return %c0_i32 : i32
  }
  func.func @transform_3(%arg0: i32) -> (i32, i32) {
    %c0_i32 = arith.constant 0 : i32
    %c0_i32_0 = arith.constant 0 : i32
    return %arg0, %c0_i32 : i32, i32
  }
}

</mosaic_0001>

<llo_original>
// kernel: binary_classification_forward.1
$region0: #{binary_classification_forward.1}
  #allocation0 [shape = 'u32[]', space=smem, size = 0x4, offset = 0x4, fixed_abs, tag = 'smem constant byte address 0x4 - core index']
  #allocation1 [shape = 'u32[144,128]{1,0:T(1,128)}', space=vmem, size = 0x12000, scoped, tag = 'internal scratch']
  #allocation2 [shape = 'f32[1]{0:T(128)S(6)}', space=smem, size = 0x200, scoped, tag = 'scoped memory for binary_classification_forward.1']
  %s0 = inlined_call_operand.vmem [shape: f32[8,32], index: 0, kind: input, shape index: {}]
  %s1 = inlined_call_operand.vmem [shape: f32[32,1], index: 1, kind: input, shape index: {}]
  %s2 = inlined_call_operand.<no memory space> [shape: f32[1], index: 2, kind: input, shape index: {}]
  %s3 = inlined_call_operand.vmem [shape: f32[8,1], index: 3, kind: output, shape index: {}]
  %s4 = sld [smem:[#allocation0]]
  $region22: #{binary_classification_forward.1} parent=0
    _
  %s6 = ssub.s32 1, %s4
  %s7 = scalar_select 0, %s6, %s4
  %8 = sst [smem:[#allocation2]] %s2
  // Predicated region
  $region2: #{binary_classification_forward.1} parent=0 // pred_check
    _
  $region3: #{binary_classification_forward.1} parent=0 // pred_check_branch
    %10 = sbr.rel (0) target = $region5
  $region4: #{binary_classification_forward.1} parent=0 // pred_region
    _
  $region5: #{binary_classification_forward.1} parent=0 // pred_fallthru
    _
  // Predicated region
  $region6: #{binary_classification_forward.1} parent=0 // pred_check
    _
  $region7: #{binary_classification_forward.1} parent=0 // pred_check_branch
    %12 = sbr.rel (0) target = $region9
  $region8: #{binary_classification_forward.1} parent=0 // pred_region
    _
  $region9: #{binary_classification_forward.1} parent=0 // pred_fallthru
    _
  // Predicated region
  $region10: #{binary_classification_forward.1} parent=0 // pred_check
    _
  $region11: #{binary_classification_forward.1} parent=0 // pred_check_branch
    %14 = sbr.rel (0) target = $region13
  $region12: #{binary_classification_forward.1} parent=0 // pred_region
    _
  $region13: #{binary_classification_forward.1} parent=0 // pred_fallthru
    _
  %v15 = vld [vmem:[%s0] sm:$0xff]
  %v16 = vld [vmem:[%s1] sm:$0xff]
  %v17 = vld [vmem:[%s1 + $0x8] sm:$0xff]
  %v18 = vld [vmem:[%s1 + $0x10] sm:$0xff]
  %v19 = vld [vmem:[%s1 + $0x18] sm:$0xff]
  %s20 = sld [smem:[#allocation2]]
  %v21 = vstv %s20
  %vm22 = vcmask 261120
  %v24 = vsel %vm22, %v15, 0
  %26 = vmatprep.subr.mxu0 0.0
  %v27 = vand.u32 %v16, 4294901760
  %28 = vmatpush1.msra.mxu0 %v27
  %29 = vmatprep.subr.mxu0 0.0
  %v30 = vand.u32 %v17, 4294901760
  %31 = vmatpush1.msra.mxu0 %v30
  %32 = vmatprep.subr.mxu0 0.0
  %v33 = vand.u32 %v18, 4294901760
  %34 = vmatpush1.msra.mxu0 %v33
  %35 = vmatprep.subr.mxu0 0.0
  %v36 = vand.u32 %v19, 4294901760
  %37 = vmatpush1.msra.mxu0 %v36
  %38 = vmatprep.subr.mxu0 0.0
  %39 = vmatpush1.msra.mxu0 0.0
  %40 = vmatprep.subr.mxu0 0.0
  %41 = vmatpush1.msra.mxu0 0.0
  %42 = vmatprep.subr.mxu0 0.0
  %43 = vmatpush1.msra.mxu0 0.0
  %44 = vmatprep.subr.mxu0 0.0
  %45 = vmatpush1.msra.mxu0 0.0
  %46 = vmatprep.subr.mxu0 0.0
  %47 = vmatpush1.msra.mxu0 0.0
  %48 = vmatprep.subr.mxu0 0.0
  %49 = vmatpush1.msra.mxu0 0.0
  %50 = vmatprep.subr.mxu0 0.0
  %51 = vmatpush1.msra.mxu0 0.0
  %52 = vmatprep.subr.mxu0 0.0
  %53 = vmatpush1.msra.mxu0 0.0
  %54 = vmatprep.subr.mxu0 0.0
  %55 = vmatpush1.msra.mxu0 0.0
  %56 = vmatprep.subr.mxu0 0.0
  %57 = vmatpush1.msra.mxu0 0.0
  %58 = vmatprep.subr.mxu0 0.0
  %59 = vmatpush1.msra.mxu0 0.0
  %60 = vmatprep.subr.mxu0 0.0
  %61 = vmatpush1.msra.mxu0 0.0
  %62 = vmatprep.subr.mxu0 0.0
  %63 = vmatpush1.msra.mxu0 0.0
  %64 = vmatprep.subr.mxu0 0.0
  %65 = vmatpush1.msra.mxu0 0.0
  %66 = vmatprep.subr.mxu0 0.0
  %67 = vmatpush1.msra.mxu0 0.0
  %68 = vmatprep.subr.mxu0 0.0
  %69 = vmatpush1.msra.mxu0 0.0
  %70 = vmatprep.subr.mxu0 0.0
  %71 = vmatpush1.msra.mxu0 0.0
  %72 = vmatprep.subr.mxu0 0.0
  %73 = vmatpush1.msra.mxu0 0.0
  %74 = vmatprep.subr.mxu0 0.0
  %75 = vmatpush1.msra.mxu0 0.0
  %76 = vmatprep.subr.mxu0 0.0
  %77 = vmatpush1.msra.mxu0 0.0
  %78 = vmatprep.subr.mxu0 0.0
  %79 = vmatpush1.msra.mxu0 0.0
  %80 = vmatprep.subr.mxu0 0.0
  %81 = vmatpush1.msra.mxu0 0.0
  %82 = vmatprep.subr.mxu0 0.0
  %83 = vmatpush1.msra.mxu0 0.0
  %84 = vmatprep.subr.mxu0 0.0
  %85 = vmatpush1.msra.mxu0 0.0
  %86 = vmatprep.subr.mxu0 0.0
  %87 = vmatpush1.msra.mxu0 0.0
  %88 = vmatprep.subr.mxu0 0.0
  %89 = vmatpush1.msra.mxu0 0.0
  %90 = vmatprep.subr.mxu0 0.0
  %91 = vmatpush1.msra.mxu0 0.0
  %92 = vmatprep.subr.mxu0 0.0
  %93 = vmatpush1.msra.mxu0 0.0
  %94 = vmatprep.mubr.f32.mxu0 0.0
  %v95 = vand.u32 %v24, 4294901760
  %v96 = vsub.f32 %v24, %v95
  %v97 = vand.u32 %v96, 4294901760
  %v98 = vsub.f32 %v96, %v97
  %v99 = vand.u32 %v98, 4294901760
  %100 = vmatmul.mubr.f32.gmra.mrb[0].mxu0 %v99
  %v101 = vpop.f32.mrb[0].mxu0
  %v102 = vadd.f32 %v21, %v101
  %v103 = vpop.f32.mrb[0].mxu0
  %104 = vdwg.mxu0
  %105 = vmatprep.subr.mxu0 0.0
  %v106 = vand.u32 %v16, 4294901760
  %v107 = vsub.f32 %v16, %v106
  %v108 = vand.u32 %v107, 4294901760
  %v109 = vsub.f32 %v107, %v108
  %v110 = vand.u32 %v109, 4294901760
  %111 = vmatpush1.msra.mxu0 %v110
  %112 = vmatprep.subr.mxu0 0.0
  %v113 = vand.u32 %v17, 4294901760
  %v114 = vsub.f32 %v17, %v113
  %v115 = vand.u32 %v114, 4294901760
  %v116 = vsub.f32 %v114, %v115
  %v117 = vand.u32 %v116, 4294901760
  %118 = vmatpush1.msra.mxu0 %v117
  %119 = vmatprep.subr.mxu0 0.0
  %v120 = vand.u32 %v18, 4294901760
  %v121 = vsub.f32 %v18, %v120
  %v122 = vand.u32 %v121, 4294901760
  %v123 = vsub.f32 %v121, %v122
  %v124 = vand.u32 %v123, 4294901760
  %125 = vmatpush1.msra.mxu0 %v124
  %126 = vmatprep.subr.mxu0 0.0
  %v127 = vand.u32 %v19, 4294901760
  %v128 = vsub.f32 %v19, %v127
  %v129 = vand.u32 %v128, 4294901760
  %v130 = vsub.f32 %v128, %v129
  %v131 = vand.u32 %v130, 4294901760
  %132 = vmatpush1.msra.mxu0 %v131
  %133 = vmatprep.subr.mxu0 0.0
  %134 = vmatpush1.msra.mxu0 0.0
  %135 = vmatprep.subr.mxu0 0.0
  %136 = vmatpush1.msra.mxu0 0.0
  %137 = vmatprep.subr.mxu0 0.0
  %138 = vmatpush1.msra.mxu0 0.0
  %139 = vmatprep.subr.mxu0 0.0
  %140 = vmatpush1.msra.mxu0 0.0
  %141 = vmatprep.subr.mxu0 0.0
  %142 = vmatpush1.msra.mxu0 0.0
  %143 = vmatprep.subr.mxu0 0.0
  %144 = vmatpush1.msra.mxu0 0.0
  %145 = vmatprep.subr.mxu0 0.0
  %146 = vmatpush1.msra.mxu0 0.0
  %147 = vmatprep.subr.mxu0 0.0
  %148 = vmatpush1.msra.mxu0 0.0
  %149 = vmatprep.subr.mxu0 0.0
  %150 = vmatpush1.msra.mxu0 0.0
  %151 = vmatprep.subr.mxu0 0.0
  %152 = vmatpush1.msra.mxu0 0.0
  %153 = vmatprep.subr.mxu0 0.0
  %154 = vmatpush1.msra.mxu0 0.0
  %155 = vmatprep.subr.mxu0 0.0
  %156 = vmatpush1.msra.mxu0 0.0
  %157 = vmatprep.subr.mxu0 0.0
  %158 = vmatpush1.msra.mxu0 0.0
  %159 = vmatprep.subr.mxu0 0.0
  %160 = vmatpush1.msra.mxu0 0.0
  %161 = vmatprep.subr.mxu0 0.0
  %162 = vmatpush1.msra.mxu0 0.0
  %163 = vmatprep.subr.mxu0 0.0
  %164 = vmatpush1.msra.mxu0 0.0
  %165 = vmatprep.subr.mxu0 0.0
  %166 = vmatpush1.msra.mxu0 0.0
  %167 = vmatprep.subr.mxu0 0.0
  %168 = vmatpush1.msra.mxu0 0.0
  %169 = vmatprep.subr.mxu0 0.0
  %170 = vmatpush1.msra.mxu0 0.0
  %171 = vmatprep.subr.mxu0 0.0
  %172 = vmatpush1.msra.mxu0 0.0
  %173 = vmatprep.subr.mxu0 0.0
  %174 = vmatpush1.msra.mxu0 0.0
  %175 = vmatprep.subr.mxu0 0.0
  %176 = vmatpush1.msra.mxu0 0.0
  %177 = vmatprep.subr.mxu0 0.0
  %178 = vmatpush1.msra.mxu0 0.0
  %179 = vmatprep.subr.mxu0 0.0
  %180 = vmatpush1.msra.mxu0 0.0
  %181 = vmatprep.subr.mxu0 0.0
  %182 = vmatpush1.msra.mxu0 0.0
  %183 = vmatprep.subr.mxu0 0.0
  %184 = vmatpush1.msra.mxu0 0.0
  %185 = vmatprep.subr.mxu0 0.0
  %186 = vmatpush1.msra.mxu0 0.0
  %187 = vmatprep.subr.mxu0 0.0
  %188 = vmatpush1.msra.mxu0 0.0
  %189 = vmatprep.mubr.f32.mxu0 0.0
  %v190 = vand.u32 %v24, 4294901760
  %191 = vmatmul.mubr.f32.gmra.mrb[0].mxu0 %v190
  %v192 = vpop.f32.mrb[0].mxu0
  %v193 = vadd.f32 %v102, %v192
  %v194 = vpop.f32.mrb[0].mxu0
  %195 = vdwg.mxu0
  %196 = vmatprep.subr.mxu0 0.0
  %v197 = vand.u32 %v16, 4294901760
  %v198 = vsub.f32 %v16, %v197
  %199 = vmatpush1.msra.mxu0 %v198
  %200 = vmatprep.subr.mxu0 0.0
  %v201 = vand.u32 %v17, 4294901760
  %v202 = vsub.f32 %v17, %v201
  %203 = vmatpush1.msra.mxu0 %v202
  %204 = vmatprep.subr.mxu0 0.0
  %v205 = vand.u32 %v18, 4294901760
  %v206 = vsub.f32 %v18, %v205
  %207 = vmatpush1.msra.mxu0 %v206
  %208 = vmatprep.subr.mxu0 0.0
  %v209 = vand.u32 %v19, 4294901760
  %v210 = vsub.f32 %v19, %v209
  %211 = vmatpush1.msra.mxu0 %v210
  %212 = vmatprep.subr.mxu0 0.0
  %213 = vmatpush1.msra.mxu0 0.0
  %214 = vmatprep.subr.mxu0 0.0
  %215 = vmatpush1.msra.mxu0 0.0
  %216 = vmatprep.subr.mxu0 0.0
  %217 = vmatpush1.msra.mxu0 0.0
  %218 = vmatprep.subr.mxu0 0.0
  %219 = vmatpush1.msra.mxu0 0.0
  %220 = vmatprep.subr.mxu0 0.0
  %221 = vmatpush1.msra.mxu0 0.0
  %222 = vmatprep.subr.mxu0 0.0
  %223 = vmatpush1.msra.mxu0 0.0
  %224 = vmatprep.subr.mxu0 0.0
  %225 = vmatpush1.msra.mxu0 0.0
  %226 = vmatprep.subr.mxu0 0.0
  %227 = vmatpush1.msra.mxu0 0.0
  %228 = vmatprep.subr.mxu0 0.0
  %229 = vmatpush1.msra.mxu0 0.0
  %230 = vmatprep.subr.mxu0 0.0
  %231 = vmatpush1.msra.mxu0 0.0
  %232 = vmatprep.subr.mxu0 0.0
  %233 = vmatpush1.msra.mxu0 0.0
  %234 = vmatprep.subr.mxu0 0.0
  %235 = vmatpush1.msra.mxu0 0.0
  %236 = vmatprep.subr.mxu0 0.0
  %237 = vmatpush1.msra.mxu0 0.0
  %238 = vmatprep.subr.mxu0 0.0
  %239 = vmatpush1.msra.mxu0 0.0
  %240 = vmatprep.subr.mxu0 0.0
  %241 = vmatpush1.msra.mxu0 0.0
  %242 = vmatprep.subr.mxu0 0.0
  %243 = vmatpush1.msra.mxu0 0.0
  %244 = vmatprep.subr.mxu0 0.0
  %245 = vmatpush1.msra.mxu0 0.0
  %246 = vmatprep.subr.mxu0 0.0
  %247 = vmatpush1.msra.mxu0 0.0
  %248 = vmatprep.subr.mxu0 0.0
  %249 = vmatpush1.msra.mxu0 0.0
  %250 = vmatprep.subr.mxu0 0.0
  %251 = vmatpush1.msra.mxu0 0.0
  %252 = vmatprep.subr.mxu0 0.0
  %253 = vmatpush1.msra.mxu0 0.0
  %254 = vmatprep.subr.mxu0 0.0
  %255 = vmatpush1.msra.mxu0 0.0
  %256 = vmatprep.subr.mxu0 0.0
  %257 = vmatpush1.msra.mxu0 0.0
  %258 = vmatprep.subr.mxu0 0.0
  %259 = vmatpush1.msra.mxu0 0.0
  %260 = vmatprep.subr.mxu0 0.0
  %261 = vmatpush1.msra.mxu0 0.0
  %262 = vmatprep.subr.mxu0 0.0
  %263 = vmatpush1.msra.mxu0 0.0
  %264 = vmatprep.subr.mxu0 0.0
  %265 = vmatpush1.msra.mxu0 0.0
  %266 = vmatprep.subr.mxu0 0.0
  %267 = vmatpush1.msra.mxu0 0.0
  %268 = vmatprep.mubr.f32.mxu0 0.0
  %v269 = vand.u32 %v24, 4294901760
  %v270 = vsub.f32 %v24, %v269
  %271 = vmatmul.mubr.f32.gmra.mrb[0].mxu0 %v270
  %v272 = vpop.f32.mrb[0].mxu0
  %v273 = vadd.f32 %v193, %v272
  %v274 = vpop.f32.mrb[0].mxu0
  %275 = vdwg.mxu0
  %276 = vmatprep.subr.mxu0 0.0
  %v277 = vand.u32 %v16, 4294901760
  %278 = vmatpush1.msra.mxu0 %v277
  %279 = vmatprep.subr.mxu0 0.0
  %v280 = vand.u32 %v17, 4294901760
  %281 = vmatpush1.msra.mxu0 %v280
  %282 = vmatprep.subr.mxu0 0.0
  %v283 = vand.u32 %v18, 4294901760
  %284 = vmatpush1.msra.mxu0 %v283
  %285 = vmatprep.subr.mxu0 0.0
  %v286 = vand.u32 %v19, 4294901760
  %287 = vmatpush1.msra.mxu0 %v286
  %288 = vmatprep.subr.mxu0 0.0
  %289 = vmatpush1.msra.mxu0 0.0
  %290 = vmatprep.subr.mxu0 0.0
  %291 = vmatpush1.msra.mxu0 0.0
  %292 = vmatprep.subr.mxu0 0.0
  %293 = vmatpush1.msra.mxu0 0.0
  %294 = vmatprep.subr.mxu0 0.0
  %295 = vmatpush1.msra.mxu0 0.0
  %296 = vmatprep.subr.mxu0 0.0
  %297 = vmatpush1.msra.mxu0 0.0
  %298 = vmatprep.subr.mxu0 0.0
  %299 = vmatpush1.msra.mxu0 0.0
  %300 = vmatprep.subr.mxu0 0.0
  %301 = vmatpush1.msra.mxu0 0.0
  %302 = vmatprep.subr.mxu0 0.0
  %303 = vmatpush1.msra.mxu0 0.0
  %304 = vmatprep.subr.mxu0 0.0
  %305 = vmatpush1.msra.mxu0 0.0
  %306 = vmatprep.subr.mxu0 0.0
  %307 = vmatpush1.msra.mxu0 0.0
  %308 = vmatprep.subr.mxu0 0.0
  %309 = vmatpush1.msra.mxu0 0.0
  %310 = vmatprep.subr.mxu0 0.0
  %311 = vmatpush1.msra.mxu0 0.0
  %312 = vmatprep.subr.mxu0 0.0
  %313 = vmatpush1.msra.mxu0 0.0
  %314 = vmatprep.subr.mxu0 0.0
  %315 = vmatpush1.msra.mxu0 0.0
  %316 = vmatprep.subr.mxu0 0.0
  %317 = vmatpush1.msra.mxu0 0.0
  %318 = vmatprep.subr.mxu0 0.0
  %319 = vmatpush1.msra.mxu0 0.0
  %320 = vmatprep.subr.mxu0 0.0
  %321 = vmatpush1.msra.mxu0 0.0
  %322 = vmatprep.subr.mxu0 0.0
  %323 = vmatpush1.msra.mxu0 0.0
  %324 = vmatprep.subr.mxu0 0.0
  %325 = vmatpush1.msra.mxu0 0.0
  %326 = vmatprep.subr.mxu0 0.0
  %327 = vmatpush1.msra.mxu0 0.0
  %328 = vmatprep.subr.mxu0 0.0
  %329 = vmatpush1.msra.mxu0 0.0
  %330 = vmatprep.subr.mxu0 0.0
  %331 = vmatpush1.msra.mxu0 0.0
  %332 = vmatprep.subr.mxu0 0.0
  %333 = vmatpush1.msra.mxu0 0.0
  %334 = vmatprep.subr.mxu0 0.0
  %335 = vmatpush1.msra.mxu0 0.0
  %336 = vmatprep.subr.mxu0 0.0
  %337 = vmatpush1.msra.mxu0 0.0
  %338 = vmatprep.subr.mxu0 0.0
  %339 = vmatpush1.msra.mxu0 0.0
  %340 = vmatprep.subr.mxu0 0.0
  %341 = vmatpush1.msra.mxu0 0.0
  %342 = vmatprep.subr.mxu0 0.0
  %343 = vmatpush1.msra.mxu0 0.0
  %344 = vmatprep.mubr.f32.mxu0 0.0
  %v345 = vand.u32 %v24, 4294901760
  %v346 = vsub.f32 %v24, %v345
  %v347 = vand.u32 %v346, 4294901760
  %348 = vmatmul.mubr.f32.gmra.mrb[0].mxu0 %v347
  %v349 = vpop.f32.mrb[0].mxu0
  %v350 = vadd.f32 %v273, %v349
  %v351 = vpop.f32.mrb[0].mxu0
  %352 = vdwg.mxu0
  %353 = vmatprep.subr.mxu0 0.0
  %v354 = vand.u32 %v16, 4294901760
  %v355 = vsub.f32 %v16, %v354
  %v356 = vand.u32 %v355, 4294901760
  %357 = vmatpush1.msra.mxu0 %v356
  %358 = vmatprep.subr.mxu0 0.0
  %v359 = vand.u32 %v17, 4294901760
  %v360 = vsub.f32 %v17, %v359
  %v361 = vand.u32 %v360, 4294901760
  %362 = vmatpush1.msra.mxu0 %v361
  %363 = vmatprep.subr.mxu0 0.0
  %v364 = vand.u32 %v18, 4294901760
  %v365 = vsub.f32 %v18, %v364
  %v366 = vand.u32 %v365, 4294901760
  %367 = vmatpush1.msra.mxu0 %v366
  %368 = vmatprep.subr.mxu0 0.0
  %v369 = vand.u32 %v19, 4294901760
  %v370 = vsub.f32 %v19, %v369
  %v371 = vand.u32 %v370, 4294901760
  %372 = vmatpush1.msra.mxu0 %v371
  %373 = vmatprep.subr.mxu0 0.0
  %374 = vmatpush1.msra.mxu0 0.0
  %375 = vmatprep.subr.mxu0 0.0
  %376 = vmatpush1.msra.mxu0 0.0
  %377 = vmatprep.subr.mxu0 0.0
  %378 = vmatpush1.msra.mxu0 0.0
  %379 = vmatprep.subr.mxu0 0.0
  %380 = vmatpush1.msra.mxu0 0.0
  %381 = vmatprep.subr.mxu0 0.0
  %382 = vmatpush1.msra.mxu0 0.0
  %383 = vmatprep.subr.mxu0 0.0
  %384 = vmatpush1.msra.mxu0 0.0
  %385 = vmatprep.subr.mxu0 0.0
  %386 = vmatpush1.msra.mxu0 0.0
  %387 = vmatprep.subr.mxu0 0.0
  %388 = vmatpush1.msra.mxu0 0.0
  %389 = vmatprep.subr.mxu0 0.0
  %390 = vmatpush1.msra.mxu0 0.0
  %391 = vmatprep.subr.mxu0 0.0
  %392 = vmatpush1.msra.mxu0 0.0
  %393 = vmatprep.subr.mxu0 0.0
  %394 = vmatpush1.msra.mxu0 0.0
  %395 = vmatprep.subr.mxu0 0.0
  %396 = vmatpush1.msra.mxu0 0.0
  %397 = vmatprep.subr.mxu0 0.0
  %398 = vmatpush1.msra.mxu0 0.0
  %399 = vmatprep.subr.mxu0 0.0
  %400 = vmatpush1.msra.mxu0 0.0
  %401 = vmatprep.subr.mxu0 0.0
  %402 = vmatpush1.msra.mxu0 0.0
  %403 = vmatprep.subr.mxu0 0.0
  %404 = vmatpush1.msra.mxu0 0.0
  %405 = vmatprep.subr.mxu0 0.0
  %406 = vmatpush1.msra.mxu0 0.0
  %407 = vmatprep.subr.mxu0 0.0
  %408 = vmatpush1.msra.mxu0 0.0
  %409 = vmatprep.subr.mxu0 0.0
  %410 = vmatpush1.msra.mxu0 0.0
  %411 = vmatprep.subr.mxu0 0.0
  %412 = vmatpush1.msra.mxu0 0.0
  %413 = vmatprep.subr.mxu0 0.0
  %414 = vmatpush1.msra.mxu0 0.0
  %415 = vmatprep.subr.mxu0 0.0
  %416 = vmatpush1.msra.mxu0 0.0
  %417 = vmatprep.subr.mxu0 0.0
  %418 = vmatpush1.msra.mxu0 0.0
  %419 = vmatprep.subr.mxu0 0.0
  %420 = vmatpush1.msra.mxu0 0.0
  %421 = vmatprep.subr.mxu0 0.0
  %422 = vmatpush1.msra.mxu0 0.0
  %423 = vmatprep.subr.mxu0 0.0
  %424 = vmatpush1.msra.mxu0 0.0
  %425 = vmatprep.subr.mxu0 0.0
  %426 = vmatpush1.msra.mxu0 0.0
  %427 = vmatprep.subr.mxu0 0.0
  %428 = vmatpush1.msra.mxu0 0.0
  %429 = vmatprep.mubr.f32.mxu0 0.0
  %v430 = vand.u32 %v24, 4294901760
  %431 = vmatmul.mubr.f32.gmra.mrb[0].mxu0 %v430
  %v432 = vpop.f32.mrb[0].mxu0
  %v433 = vadd.f32 %v350, %v432
  %v434 = vpop.f32.mrb[0].mxu0
  %435 = vdwg.mxu0
  %436 = vmatprep.subr.mxu0 0.0
  %v437 = vand.u32 %v16, 4294901760
  %438 = vmatpush1.msra.mxu0 %v437
  %439 = vmatprep.subr.mxu0 0.0
  %v440 = vand.u32 %v17, 4294901760
  %441 = vmatpush1.msra.mxu0 %v440
  %442 = vmatprep.subr.mxu0 0.0
  %v443 = vand.u32 %v18, 4294901760
  %444 = vmatpush1.msra.mxu0 %v443
  %445 = vmatprep.subr.mxu0 0.0
  %v446 = vand.u32 %v19, 4294901760
  %447 = vmatpush1.msra.mxu0 %v446
  %448 = vmatprep.subr.mxu0 0.0
  %449 = vmatpush1.msra.mxu0 0.0
  %450 = vmatprep.subr.mxu0 0.0
  %451 = vmatpush1.msra.mxu0 0.0
  %452 = vmatprep.subr.mxu0 0.0
  %453 = vmatpush1.msra.mxu0 0.0
  %454 = vmatprep.subr.mxu0 0.0
  %455 = vmatpush1.msra.mxu0 0.0
  %456 = vmatprep.subr.mxu0 0.0
  %457 = vmatpush1.msra.mxu0 0.0
  %458 = vmatprep.subr.mxu0 0.0
  %459 = vmatpush1.msra.mxu0 0.0
  %460 = vmatprep.subr.mxu0 0.0
  %461 = vmatpush1.msra.mxu0 0.0
  %462 = vmatprep.subr.mxu0 0.0
  %463 = vmatpush1.msra.mxu0 0.0
  %464 = vmatprep.subr.mxu0 0.0
  %465 = vmatpush1.msra.mxu0 0.0
  %466 = vmatprep.subr.mxu0 0.0
  %467 = vmatpush1.msra.mxu0 0.0
  %468 = vmatprep.subr.mxu0 0.0
  %469 = vmatpush1.msra.mxu0 0.0
  %470 = vmatprep.subr.mxu0 0.0
  %471 = vmatpush1.msra.mxu0 0.0
  %472 = vmatprep.subr.mxu0 0.0
  %473 = vmatpush1.msra.mxu0 0.0
  %474 = vmatprep.subr.mxu0 0.0
  %475 = vmatpush1.msra.mxu0 0.0
  %476 = vmatprep.subr.mxu0 0.0
  %477 = vmatpush1.msra.mxu0 0.0
  %478 = vmatprep.subr.mxu0 0.0
  %479 = vmatpush1.msra.mxu0 0.0
  %480 = vmatprep.subr.mxu0 0.0
  %481 = vmatpush1.msra.mxu0 0.0
  %482 = vmatprep.subr.mxu0 0.0
  %483 = vmatpush1.msra.mxu0 0.0
  %484 = vmatprep.subr.mxu0 0.0
  %485 = vmatpush1.msra.mxu0 0.0
  %486 = vmatprep.subr.mxu0 0.0
  %487 = vmatpush1.msra.mxu0 0.0
  %488 = vmatprep.subr.mxu0 0.0
  %489 = vmatpush1.msra.mxu0 0.0
  %490 = vmatprep.subr.mxu0 0.0
  %491 = vmatpush1.msra.mxu0 0.0
  %492 = vmatprep.subr.mxu0 0.0
  %493 = vmatpush1.msra.mxu0 0.0
  %494 = vmatprep.subr.mxu0 0.0
  %495 = vmatpush1.msra.mxu0 0.0
  %496 = vmatprep.subr.mxu0 0.0
  %497 = vmatpush1.msra.mxu0 0.0
  %498 = vmatprep.subr.mxu0 0.0
  %499 = vmatpush1.msra.mxu0 0.0
  %500 = vmatprep.subr.mxu0 0.0
  %501 = vmatpush1.msra.mxu0 0.0
  %502 = vmatprep.subr.mxu0 0.0
  %503 = vmatpush1.msra.mxu0 0.0
  %504 = vmatprep.mubr.f32.mxu0 0.0
  %v505 = vand.u32 %v24, 4294901760
  %506 = vmatmul.mubr.f32.gmra.mrb[0].mxu0 %v505
  %v507 = vpop.f32.mrb[0].mxu0
  %v508 = vadd.f32 %v433, %v507
  %v509 = vpop.f32.mrb[0].mxu0
  %510 = vdwg.mxu0
  %v511 = vxor.u32 %v508, 2147483648
  %v512 = vmul.f32 %v511, 1.442695
  %v513 = vpow.pop %v512
  %v514 = vadd.f32 %v513, 1.0
  %v515 = vrcp.pop %v514
  %v516 = vmul.f32 1.0, %v515
  %vm517 = vcmask 7168
  %518 = vst.msk [vmem:[%s3] sm:$0xff] %vm517, %v516
  // Predicated region
  $region14: #{binary_classification_forward.1} parent=0 // pred_check
    _
  $region15: #{binary_classification_forward.1} parent=0 // pred_check_branch
    %520 = sbr.rel (0) target = $region17
  $region16: #{binary_classification_forward.1} parent=0 // pred_region
    _
  $region17: #{binary_classification_forward.1} parent=0 // pred_fallthru
    _
  // Predicated region
  $region18: #{binary_classification_forward.1} parent=0 // pred_check
    _
  $region19: #{binary_classification_forward.1} parent=0 // pred_check_branch
    %522 = sbr.rel (0) target = $region21
  $region20: #{binary_classification_forward.1} parent=0 // pred_region
    _
  $region21: #{binary_classification_forward.1} parent=0 // pred_fallthru
    _

</llo_original>
